<compile_context>
chip_gen: v5e
topology: v5e:2x2
jax: 0.10.0
libtpu: 0.0.40
codegen_flags: <defaults>
</compile_context>

<pallas_src>
import functools

import jax
import jax.numpy as jnp
from jax.experimental import pallas as pl
from jax.experimental.pallas import tpu as pltpu


def _round_up(x: int, m: int) -> int:
    return ((x + m - 1) // m) * m


def _linear_kernel(w_ref, b_ref, x_ref, o_ref):
    # w_ref: SMEM (F,) f32, b_ref: SMEM (1,) f32
    # x_ref: VMEM (F, TN) f32 (transposed tile), o_ref: VMEM (1, TN) f32
    # Pure elementwise VPU FMAs over the lane-dense batch axis; no XLU
    # reduction, no MXU.
    acc = x_ref[0:1, :] * w_ref[0]
    for j in range(1, x_ref.shape[0]):          # F is tiny & static -> unrolled
        acc = acc + x_ref[j:j + 1, :] * w_ref[j]
    o_ref[...] = (acc + b_ref[0]).astype(o_ref.dtype)


@functools.partial(jax.jit, static_argnames=("tile_n", "min_pallas_rows"))
def linear_regression_forward(xss, weight, bias, *, tile_n: int = 131072,
                              min_pallas_rows: int = 1024):
    """Pallas equivalent of nn.Linear(2, 1).forward(xss).

    xss:    (N, 2) float32
    weight: (1, 2) float32   (PyTorch layout: (out_features, in_features))
    bias:   (1,)   float32
    returns (N, 1) float32
    """
    n, f = xss.shape
    w_flat = weight.reshape(-1)                       # (F,)
    b_flat = bias.reshape(-1)                         # (1,)

    # For tiny batches the pallas_call launch + DMA setup dwarfs the ~2N FLOPs;
    # fall back to plain XLA. (The demo below forces the kernel path.)
    if n < min_pallas_rows:
        return xss @ weight.T + bias

    # Tile along the batch/lane axis: multiple of 128, clamped for small N.
    tn = min(_round_up(tile_n, 128), _round_up(n, 128))
    n_pad = _round_up(n, tn)

    # Wrapper-side layout plumbing: transpose to (F, N) and pad the lane axis
    # so every tile (including the last) is full width and unmasked.
    x_t = jnp.transpose(xss)                          # (F, N)
    if n_pad != n:
        x_t = jnp.pad(x_t, ((0, 0), (0, n_pad - n)))  # (F, N_pad)

    out_t = pl.pallas_call(
        _linear_kernel,
        out_shape=jax.ShapeDtypeStruct((1, n_pad), xss.dtype),
        grid=(n_pad // tn,),
        in_specs=[
            pl.BlockSpec(memory_space=pltpu.MemorySpace.SMEM),   # weight (F,)
            pl.BlockSpec(memory_space=pltpu.MemorySpace.SMEM),   # bias   (1,)
            pl.BlockSpec((f, tn), lambda i: (0, i)),             # x tile
        ],
        out_specs=pl.BlockSpec((1, tn), lambda i: (0, i)),
        compiler_params=pltpu.CompilerParams(
            dimension_semantics=("parallel",)),
    )(w_flat, b_flat, x_t)

    return out_t[0, :n].reshape(n, 1)


if __name__ == "__main__":
    key = jax.random.PRNGKey(0)
    k_x, k_w, k_b = jax.random.split(key, 3)

    # Small deterministic example consistent with the module: batch of 8
    # samples, 2 features each (nn.Linear(2, 1) shapes/init bounds).
    N, F = 8, 2
    xss = jax.random.normal(k_x, (N, F), dtype=jnp.float32)
    bound = 1.0 / jnp.sqrt(jnp.float32(F))
    weight = jax.random.uniform(k_w, (1, F), jnp.float32, -bound, bound)
    bias = jax.random.uniform(k_b, (1,), jnp.float32, -bound, bound)

    # Force the Pallas path even at N=8 (single 128-lane tile).
    out = linear_regression_forward(xss, weight, bias, min_pallas_rows=0)
    out = jax.block_until_ready(out)
    ref = xss @ weight.T + bias
    assert out.shape == (N, 1)
    assert jnp.allclose(out, ref, atol=1e-5, rtol=1e-5)

    # Also exercise the tiled/gridded path with a ragged batch (5 tiles of 256,
    # padded tail) to validate multi-step pipelining + tail handling.
    N2 = 1237
    xss2 = jax.random.normal(jax.random.PRNGKey(1), (N2, F), dtype=jnp.float32)
    out2 = linear_regression_forward(xss2, weight, bias, tile_n=256)
    out2 = jax.block_until_ready(out2)
    ref2 = xss2 @ weight.T + bias
    assert out2.shape == (N2, 1)
    assert jnp.allclose(out2, ref2, atol=1e-5, rtol=1e-5)

    print("KERNEL_OK")
</pallas_src>

<mosaic_0001>
module attributes {stable_mosaic.version = 11 : i64} {
  func.func @_linear_kernel(%arg0: i32, %arg1: memref<2xf32, #tpu.memory_space<smem>>, %arg2: memref<1xf32, #tpu.memory_space<smem>>, %arg3: memref<2x128xf32, #tpu.memory_space<vmem>>, %arg4: memref<1x128xf32, #tpu.memory_space<vmem>>) attributes {dimension_semantics = [#tpu.dimension_semantics<parallel>], iteration_bounds = array<i64: 1>, scalar_prefetch = 0 : i64, scratch_operands = 0 : i64, tpu.core_type = #tpu.core_type<tc>, window_params = [{transform_indices = @transform_0, window_bounds = array<i64: 2>}, {transform_indices = @transform_1, window_bounds = array<i64: 1>}, {transform_indices = @transform_2, window_bounds = array<i64: 2, 128>}, {transform_indices = @transform_3, window_bounds = array<i64: 1, 128>}]} {
    %c0 = arith.constant 0 : index
    %c0_0 = arith.constant 0 : index
    %0 = vector.load %arg3[%c0, %c0_0] : memref<2x128xf32, #tpu.memory_space<vmem>>, vector<1x128xf32>
    %c0_1 = arith.constant 0 : index
    %1 = memref.load %arg1[%c0_1] : memref<2xf32, #tpu.memory_space<smem>>
    %2 = vector.broadcast %1 : f32 to vector<1x128xf32>
    %3 = arith.mulf %0, %2 : vector<1x128xf32>
    %c1 = arith.constant 1 : index
    %c0_2 = arith.constant 0 : index
    %4 = vector.load %arg3[%c1, %c0_2] : memref<2x128xf32, #tpu.memory_space<vmem>>, vector<1x128xf32>
    %c1_3 = arith.constant 1 : index
    %5 = memref.load %arg1[%c1_3] : memref<2xf32, #tpu.memory_space<smem>>
    %6 = vector.broadcast %5 : f32 to vector<1x128xf32>
    %7 = arith.mulf %4, %6 : vector<1x128xf32>
    %8 = arith.addf %3, %7 : vector<1x128xf32>
    %c0_4 = arith.constant 0 : index
    %9 = memref.load %arg2[%c0_4] : memref<1xf32, #tpu.memory_space<smem>>
    %10 = vector.broadcast %9 : f32 to vector<1x128xf32>
    %11 = arith.addf %8, %10 : vector<1x128xf32>
    %c0_5 = arith.constant 0 : index
    %c0_6 = arith.constant 0 : index
    %12 = vector.load %arg4[%c0_5, %c0_6] : memref<1x128xf32, #tpu.memory_space<vmem>>, vector<1x128xf32>
    tpu.vector_store %arg4[%c0_5, %c0_6], %11 {strides = array<i32>} : memref<1x128xf32, #tpu.memory_space<vmem>>, vector<1x128xf32>,
    return
  }
  func.func @transform_0(%arg0: i32) -> i32 {
    %c0_i32 = arith.constant 0 : i32
    %c0_i32_0 = arith.constant 0 : i32
    return %c0_i32 : i32
  }
  func.func @transform_1(%arg0: i32) -> i32 {
    %c0_i32 = arith.constant 0 : i32
    %c0_i32_0 = arith.constant 0 : i32
    return %c0_i32 : i32
  }
  func.func @transform_2(%arg0: i32) -> (i32, i32) {
    %c0_i32 = arith.constant 0 : i32
    %c0_i32_0 = arith.constant 0 : i32
    return %c0_i32, %arg0 : i32, i32
  }
  func.func @transform_3(%arg0: i32) -> (i32, i32) {
    %c0_i32 = arith.constant 0 : i32
    %c0_i32_0 = arith.constant 0 : i32
    return %c0_i32, %arg0 : i32, i32
  }
}

</mosaic_0001>

<llo_original>
// kernel: linear_regression_forward.1
$region0: #{linear_regression_forward.1}
  #allocation0 [shape = 'u32[]', space=smem, size = 0x4, offset = 0x4, fixed_abs, tag = 'smem constant byte address 0x4 - core index']
  #allocation1 [shape = 'u32[72,128]{1,0:T(1,128)}', space=vmem, size = 0x9000, scoped, tag = 'internal scratch']
  #allocation2 [shape = 'f32[1]{0:T(128)S(6)}', space=smem, size = 0x200, scoped, tag = 'scoped memory for linear_regression_forward.1']
  %s0 = inlined_call_operand.vmem [shape: f32[2], index: 0, kind: input, shape index: {}]
  %s1 = inlined_call_operand.<no memory space> [shape: f32[1], index: 1, kind: input, shape index: {}]
  %s2 = inlined_call_operand.vmem [shape: f32[2,128], index: 2, kind: input, shape index: {}]
  %s3 = inlined_call_operand.vmem [shape: f32[1,128], index: 3, kind: output, shape index: {}]
  %s4 = sld [smem:[#allocation0]]
  $region26: #{linear_regression_forward.1} parent=0
    _
  %s6 = ssub.s32 1, %s4
  %s7 = scalar_select 0, %s6, %s4
  %8 = sst [smem:[#allocation2]] %s1
  $region1: #{linear_regression_forward.1} parent=0
    #allocation3 [shape = 'u8[512]{0}', space=smem, size = 0x200, scoped, tag = 'input window, operand 0, single buffered']
    #allocation4 [shape = 's32[1]{0}', space=sflag, size = 0x4, scoped, tag = 'scoped memory for linear_regression_forward.1']
    %9 = vsyncpa [#allocation4], 0
    // Predicated region
    $region2: #{linear_regression_forward.1} parent=1 // pred_check
      _
    $region3: #{linear_regression_forward.1} parent=1 // pred_check_branch
      %11 = sbr.rel (0) target = $region5
    $region4: #{linear_regression_forward.1} parent=1 // pred_region
      %13 = vsyncadd [#allocation4], 0
      %s15 = sshll.u32 %s0, 4
      %s16 = int_to_ptr.vmem [resolvable:$true] %s15
      %18 = dma.vmem_to_smem %s16, 16, [#allocation3], [#allocation4]
    $region5: #{linear_regression_forward.1} parent=1 // pred_fallthru
      _
    // Predicated region
    $region6: #{linear_regression_forward.1} parent=1 // pred_check
      _
    $region7: #{linear_regression_forward.1} parent=1 // pred_check_branch
      %20 = sbr.rel (0) target = $region9
    $region8: #{linear_regression_forward.1} parent=1 // pred_region
      _
    $region9: #{linear_regression_forward.1} parent=1 // pred_fallthru
      _
    // Predicated region
    $region10: #{linear_regression_forward.1} parent=1 // pred_check
      _
    $region11: #{linear_regression_forward.1} parent=1 // pred_check_branch
      %22 = sbr.rel (0) target = $region13
    $region12: #{linear_regression_forward.1} parent=1 // pred_region
      _
    $region13: #{linear_regression_forward.1} parent=1 // pred_fallthru
      _
    // Predicated region
    $region14: #{linear_regression_forward.1} parent=1 // pred_check
      _
    $region15: #{linear_regression_forward.1} parent=1 // pred_check_branch
      %24 = sbr.rel (0) target = $region17
    $region16: #{linear_regression_forward.1} parent=1 // pred_region
      %26 = dma.done [#allocation4], 16
    $region17: #{linear_regression_forward.1} parent=1 // pred_fallthru
      _
    %27 = sfence
    %v28 = vld [vmem:[%s2] sm:$0x1]
    %s29 = sld [smem:[#allocation3]]
    %v30 = vstv %s29
    %v31 = vmul.f32 %v28, %v30
    %v32 = vld [vmem:[%s2 + $0x1] sm:$0x1]
    %s33 = sld [smem:[#allocation3 + $0x1]]
    %v34 = vstv %s33
    %v35 = vmul.f32 %v32, %v34
    %v36 = vadd.f32 %v31, %v35
    %s37 = sld [smem:[#allocation2]]
    %v38 = vstv %s37
    %v39 = vadd.f32 %v36, %v38
    %40 = vst [vmem:[%s3] sm:$0x1] %v39
    // Predicated region
    $region18: #{linear_regression_forward.1} parent=1 // pred_check
      _
    $region19: #{linear_regression_forward.1} parent=1 // pred_check_branch
      %42 = sbr.rel (0) target = $region21
    $region20: #{linear_regression_forward.1} parent=1 // pred_region
      _
    $region21: #{linear_regression_forward.1} parent=1 // pred_fallthru
      _
    // Predicated region
    $region22: #{linear_regression_forward.1} parent=1 // pred_check
      _
    $region23: #{linear_regression_forward.1} parent=1 // pred_check_branch
      %44 = sbr.rel (0) target = $region25
    $region24: #{linear_regression_forward.1} parent=1 // pred_region
      _
    $region25: #{linear_regression_forward.1} parent=1 // pred_fallthru
      _
    %45 = vsyncpa [#allocation4], 1

</llo_original>
